<compile_context>
chip_gen: v7x
topology: tpu7x:2x2x1
jax: 0.10.0
libtpu: 0.0.40
codegen_flags: <defaults>
</compile_context>

<pallas_src>
import jax
import jax.numpy as jnp
from jax.experimental import pallas as pl
from jax.experimental.pallas import tpu as pltpu


def _relu_kernel(x_ref, o_ref):
    # Elementwise max(x, 0) on one tile; dtype preserved (no f32 upcast ->
    # no extra HBM traffic for bf16/f16/int8 inputs).
    o_ref[...] = jnp.maximum(x_ref[...], 0)


def _tpu_tiling_defaults():
    """(max_block_bytes, vmem_limit_bytes) per TPU generation."""
    kind = ""
    try:
        kind = jax.devices()[0].device_kind.lower()
    except Exception:
        pass
    mib = 1024 * 1024
    if "v7" in kind:        # 64 MiB physical VMEM, ~3.2 TB/s HBM per TC
        return 8 * mib, 48 * mib
    if "v6" in kind:        # 128 MiB physical VMEM, ~1.4 TB/s HBM
        return 6 * mib, 48 * mib
    if "v5" in kind:        # 128 MiB physical, 16 MiB default scoped limit
        return 4 * mib, 32 * mib
    return 2 * mib, None    # unknown backend: stay under any default limit


def _sublane_multiple(dtype):
    # Sub-32-bit dtypes pack 2/4 rows per sublane; align row tiles to the
    # packed multiple so every store is a full unmasked vst.
    itemsize = jnp.dtype(dtype).itemsize
    return max(8, 8 * (4 // max(1, itemsize)))


def _relu_tiled_2d(flat, *, max_block_bytes, vmem_limit_bytes, inplace):
    """Tiled 2-D pass over a flat array whose length is a multiple of 128."""
    total = flat.shape[0]
    dtype = flat.dtype
    itemsize = jnp.dtype(dtype).itemsize
    sub = _sublane_multiple(dtype)

    # Lane width: largest lane-dense width that divides `total` exactly, so no
    # padding is ever needed (128 always works since total % 128 == 0).
    cols = 128
    for c in (2048, 1024, 512, 256):
        if total % c == 0:
            cols = c
            break
    rows = total // cols
    x2d = flat.reshape(rows, cols)          # contiguous reshape: no HBM copy

    # Row tile: sublane-aligned, capped so one tile <= max_block_bytes
    # (double-buffered in + out stays within the scoped VMEM limit).
    row_bytes = cols * itemsize
    max_rows = max(sub, (max_block_bytes // row_bytes) // sub * sub)
    if rows > max_rows:
        block_rows = max_rows
    elif rows > 2 * sub:
        # Fits in one tile, but split into >= 2 grid steps so both v7x
        # TensorCores can stream concurrently on the "parallel" axis.
        half = -(-rows // 2)
        block_rows = min(max_rows, -(-half // sub) * sub)
    else:
        block_rows = rows                   # single full-extent block (valid)

    grid = (pl.cdiv(rows, block_rows),)     # partial tail block: Pallas masks it

    cp = dict(dimension_semantics=("parallel",))
    if vmem_limit_bytes:
        cp["vmem_limit_bytes"] = int(vmem_limit_bytes)

    out2d = pl.pallas_call(
        _relu_kernel,
        out_shape=jax.ShapeDtypeStruct((rows, cols), dtype),
        grid=grid,
        in_specs=[pl.BlockSpec((block_rows, cols), lambda i: (i, 0))],
        out_specs=pl.BlockSpec((block_rows, cols), lambda i: (i, 0)),
        input_output_aliases=({0: 0} if inplace else {}),
        compiler_params=pltpu.CompilerParams(**cp),
    )(x2d)
    return out2d.reshape(total)


# Ragged (len % 128 != 0) inputs up to this size run as one whole-array block
# (kept small so worst-case layout padding still fits default scoped VMEM).
_SMALL_RAGGED_BYTES = 512 * 1024


def relu_forward(x, *, inplace=False, max_block_bytes=None, vmem_limit_bytes=None):
    """ReLU(x) = max(x, 0); same shape and dtype as the input."""
    orig_shape = x.shape
    total = x.size
    if total == 0:
        return x

    if max_block_bytes is None or vmem_limit_bytes is None:
        bb, vl = _tpu_tiling_defaults()
        max_block_bytes = bb if max_block_bytes is None else max_block_bytes
        vmem_limit_bytes = vl if vmem_limit_bytes is None else vmem_limit_bytes

    flat = x.reshape(-1)
    itemsize = jnp.dtype(x.dtype).itemsize

    if total % 128 == 0:
        # Common NN case: no pad, no slice -- only free contiguous reshapes.
        out_flat = _relu_tiled_2d(
            flat, max_block_bytes=max_block_bytes,
            vmem_limit_bytes=vmem_limit_bytes, inplace=inplace)
        return out_flat.reshape(orig_shape)

    if total * itemsize <= _SMALL_RAGGED_BYTES:
        # Ragged but small: one whole-array block, exactly-sized output,
        # Mosaic masks the partial lanes. No pad / no slice passes.
        cp = {}
        if vmem_limit_bytes:
            cp["vmem_limit_bytes"] = int(vmem_limit_bytes)
        out2d = pl.pallas_call(
            _relu_kernel,
            out_shape=jax.ShapeDtypeStruct((1, total), x.dtype),
            input_output_aliases=({0: 0} if inplace else {}),
            compiler_params=pltpu.CompilerParams(**cp),
        )(flat.reshape(1, total))
        return out2d.reshape(orig_shape)

    # Large AND ragged (rare): minimal pad to the next multiple of 128 lanes.
    # TODO(synk): handle the true tail in-kernel (scalar-prefetch `total` +
    # masked store) to also drop this pad/slice pass for huge ragged inputs.
    padded = pl.cdiv(total, 128) * 128
    flat_p = jnp.pad(flat, (0, padded - total))
    out_flat = _relu_tiled_2d(
        flat_p, max_block_bytes=max_block_bytes,
        vmem_limit_bytes=vmem_limit_bytes, inplace=False)
    return out_flat[:total].reshape(orig_shape)


def relu_reference(x):
    return jnp.maximum(x, 0)


if __name__ == "__main__":
    key = jax.random.PRNGKey(0)
    k1, k2, k3 = jax.random.split(key, 3)

    # (N, *) contract: small 4-D activation with a 128-aligned element count.
    x = jax.random.normal(k1, (2, 4, 16, 16), dtype=jnp.float32)
    out = jax.block_until_ready(relu_forward(x))
    ref = relu_reference(x)
    assert out.shape == x.shape and out.dtype == x.dtype
    assert jnp.array_equal(out, ref), float(jnp.max(jnp.abs(out - ref)))

    # inplace=True variant -> input_output_aliases wiring (identical math).
    out_ip = jax.block_until_ready(relu_forward(x, inplace=True))
    assert jnp.array_equal(out_ip, ref)

    # Ragged (non-multiple-of-128) bf16 input: exactly-sized single-block path.
    x_bf16 = jax.random.normal(k2, (3, 5, 7), dtype=jnp.bfloat16)
    out_bf16 = jax.block_until_ready(relu_forward(x_bf16))
    assert out_bf16.shape == x_bf16.shape and out_bf16.dtype == jnp.bfloat16
    assert jnp.array_equal(out_bf16, relu_reference(x_bf16))

    # Multi-step grid with a partial tail block (rows not a multiple of the
    # row tile) exercising Pallas's masked tail writes.
    x_tail = jax.random.normal(k3, (2, 3, 13, 384), dtype=jnp.float32)
    out_tail = jax.block_until_ready(relu_forward(x_tail))
    assert jnp.array_equal(out_tail, relu_reference(x_tail))

    print("KERNEL_OK")
</pallas_src>

<mosaic_0001>
module attributes {stable_mosaic.version = 11 : i64} {
  func.func @_relu_kernel(%arg0: i32, %arg1: memref<1x2048xf32, #tpu.memory_space<vmem>>, %arg2: memref<1x2048xf32, #tpu.memory_space<vmem>>) attributes {dimension_semantics = [#tpu.dimension_semantics<parallel>], iteration_bounds = array<i64: 1>, scalar_prefetch = 0 : i64, scratch_operands = 0 : i64, tpu.core_type = #tpu.core_type<tc>, window_params = [{transform_indices = @transform_0, window_bounds = array<i64: 1, 2048>}, {transform_indices = @transform_1, window_bounds = array<i64: 1, 2048>}]} {
    %c0 = arith.constant 0 : index
    %c0_0 = arith.constant 0 : index
    %0 = vector.load %arg1[%c0, %c0_0] : memref<1x2048xf32, #tpu.memory_space<vmem>>, vector<1x2048xf32>
    %cst = arith.constant 0.000000e+00 : f32
    %1 = vector.broadcast %cst : f32 to vector<1x2048xf32>
    %2 = arith.maximumf %0, %1 : vector<1x2048xf32>
    %c0_1 = arith.constant 0 : index
    %c0_2 = arith.constant 0 : index
    %3 = vector.load %arg2[%c0_1, %c0_2] : memref<1x2048xf32, #tpu.memory_space<vmem>>, vector<1x2048xf32>
    tpu.vector_store %arg2[%c0_1, %c0_2], %2 {strides = array<i32>} : memref<1x2048xf32, #tpu.memory_space<vmem>>, vector<1x2048xf32>,
    return
  }
  func.func @transform_0(%arg0: i32) -> (i32, i32) {
    %c0_i32 = arith.constant 0 : i32
    %c0_i32_0 = arith.constant 0 : i32
    return %arg0, %c0_i32 : i32, i32
  }
  func.func @transform_1(%arg0: i32) -> (i32, i32) {
    %c0_i32 = arith.constant 0 : i32
    %c0_i32_0 = arith.constant 0 : i32
    return %arg0, %c0_i32 : i32, i32
  }
}

</mosaic_0001>

<llo_original>
// kernel: tpu_custom_call.1
$region0: #{tpu_custom_call.1}
  #allocation0 [shape = 'u32[]', space=smem, size = 0x4, offset = 0x4, fixed_abs, tag = 'smem constant byte address 0x4 - core index']
  #allocation1 [shape = 'u32[144,128]{1,0:T(1,128)}', space=vmem, size = 0x12000, scoped, tag = 'internal scratch']
  %s0 = inlined_call_operand.hbm [shape: f32[1,2048], index: 0, kind: input, shape index: {}]
  %s1 = inlined_call_operand.hbm [shape: f32[1,2048], index: 1, kind: output, shape index: {}]
  %s2 = sld [smem:[#allocation0]]
  $region18: #{tpu_custom_call.1} parent=0
    _
  %s4 = ssub.s32 1, %s2
  %s5 = scalar_select 0, %s4, %s2
  $region1: #{tpu_custom_call.1} parent=0
    #allocation2 [shape = 'u8[8192]{0}', space=vmem, size = 0x2000, scoped, tag = 'input window, operand 0, single buffered']
    #allocation3 [shape = 's32[1]{0}', space=sflag, size = 0x4, scoped, tag = 'scoped memory for tpu_custom_call.1']
    #allocation4 [shape = 's32[1]{0}', space=sflag, size = 0x4, scoped, tag = 'scoped memory for tpu_custom_call.1']
    #allocation5 [shape = 'u8[8192]{0}', space=vmem, size = 0x2000, scoped, tag = 'output window, operand 0, single buffered']
    %6 = vsyncpa [#allocation3], 0
    %7 = vsyncpa [#allocation4], 0
    // Predicated region
    $region2: #{tpu_custom_call.1} parent=1 // pred_check
      _
    $region3: #{tpu_custom_call.1} parent=1 // pred_check_branch
      %9 = sbr.rel (0) target = $region5
    $region4: #{tpu_custom_call.1} parent=1 // pred_region
      %s11 = ssub.s32 256, 256
      %12 = vsyncadd [#allocation3], %s11
      %s14 = sshll.u32 [#allocation2], 4
      %s15 = int_to_ptr.vmem [resolvable:$true] %s14
      %17 = dma.hbm_to_vmem [thread:$0]  %s0, 256, %s15, [#allocation3]
    $region5: #{tpu_custom_call.1} parent=1 // pred_fallthru
      _
    // Predicated region
    $region6: #{tpu_custom_call.1} parent=1 // pred_check
      _
    $region7: #{tpu_custom_call.1} parent=1 // pred_check_branch
      %19 = sbr.rel (0) target = $region9
    $region8: #{tpu_custom_call.1} parent=1 // pred_region
      %20 = dma.done [#allocation3], 256
    $region9: #{tpu_custom_call.1} parent=1 // pred_fallthru
      _
    %v21 = vld [vmem:[#allocation2] sm:$0xff]
    %v22 = vld [vmem:[#allocation2 + $0x8] sm:$0xff]
    %v23 = vmax.f32 %v21, 0.0
    %v24 = vmax.f32 %v22, 0.0
    %25 = vst [vmem:[#allocation5] sm:$0xff] %v23
    %26 = vst [vmem:[#allocation5 + $0x8] sm:$0xff] %v24
    // Predicated region
    $region10: #{tpu_custom_call.1} parent=1 // pred_check
      _
    $region11: #{tpu_custom_call.1} parent=1 // pred_check_branch
      %28 = sbr.rel (0) target = $region13
    $region12: #{tpu_custom_call.1} parent=1 // pred_region
      %s30 = ssub.s32 256, 256
      %31 = vsyncadd [#allocation4], %s30
      %s33 = sshll.u32 [#allocation5], 4
      %s34 = int_to_ptr.vmem [resolvable:$true] %s33
      %36 = dma.vmem_to_hbm [thread:$0]  %s34, 256, %s1, [#allocation4]
    $region13: #{tpu_custom_call.1} parent=1 // pred_fallthru
      _
    // Predicated region
    $region14: #{tpu_custom_call.1} parent=1 // pred_check
      _
    $region15: #{tpu_custom_call.1} parent=1 // pred_check_branch
      %38 = sbr.rel (0) target = $region17
    $region16: #{tpu_custom_call.1} parent=1 // pred_region
      %39 = dma.done [#allocation4], 256
    $region17: #{tpu_custom_call.1} parent=1 // pred_fallthru
      _
    %40 = vsyncpa [#allocation3], 1
    %41 = vsyncpa [#allocation4], 1

</llo_original>
